<compile_context>
chip_gen: v7x
topology: tpu7x:2x2x1
jax: 0.10.0
libtpu: 0.0.40
codegen_flags: <defaults>
</compile_context>

<pallas_src>
import functools
import itertools

import jax
import jax.numpy as jnp
from jax.experimental import pallas as pl
from jax.experimental.pallas import tpu as pltpu


def hfm_kernel(w0_ref, w_ref, v0_ref, y_ref, *, lane_strip):
    # w0_ref: (1,)                    SMEM f32   global bias
    # w_ref : (F, TB)                 VMEM f32   linear weights, batch on lanes
    # v0_ref: (O-1, m, d, TB)         VMEM bf16/f32  field-aggregated embeddings
    # y_ref : (1, TB)                 VMEM f32   per-row prediction
    order_minus_1, num_field, d, tb = v0_ref.shape
    ls = min(lane_strip, tb)
    assert tb % ls == 0

    w0 = w0_ref[0]

    # Strip-mine over 128-lane slabs so the DP accumulators a[1..t] stay
    # register-resident ((d, ls) f32 each) instead of round-tripping VMEM.
    for s in range(tb // ls):
        l0 = s * ls

        # linear part: w0 + sum_f w[f, b]   (sublane reduction -> (1, ls))
        y = w0 + jnp.sum(w_ref[:, l0:l0 + ls], axis=0, keepdims=True)

        # interaction part: order-t term == elementary symmetric polynomial
        # e_t of the level-(t-2) field embeddings, summed over d (ANOVA DP).
        for lvl in range(order_minus_1):
            t = lvl + 2
            a = [None] * (t + 1)          # a[k] = e_k of fields seen so far
            for f in range(num_field):
                vf = v0_ref[lvl, f, :, l0:l0 + ls].astype(jnp.float32)  # (d, ls)
                for k in range(min(t, f + 1), 1, -1):
                    if a[k - 1] is None:
                        continue
                    prod = vf * a[k - 1]
                    a[k] = prod if a[k] is None else a[k] + prod
                a[1] = vf if a[1] is None else a[1] + vf
            if a[t] is not None:
                y = y + jnp.sum(a[t], axis=0, keepdims=True)  # sum over d

        y_ref[:, l0:l0 + ls] = y


def _round_up(x, m):
    return ((x + m - 1) // m) * m


def hfm_forward(x, w_table, V_table, M, w0, alpha, beta, *,
                max_block_b=2048, v0_dtype=jnp.bfloat16, lane_strip=128):
    order_minus_1, n, d = V_table.shape
    order = order_minus_1 + 1
    B, F = x.shape
    num_field = M.shape[0]

    is_bf16 = jnp.dtype(v0_dtype) == jnp.dtype(jnp.bfloat16)
    compute_dtype = jnp.bfloat16 if is_bf16 else jnp.float32

    # ---- batch tiling: lane-dense tiles of TB rows; >= 2 blocks whenever
    # possible so the parallel grid axis shards across both v7x TensorCores.
    if B <= 128:
        TB = 128
    else:
        TB = min(max_block_b, _round_up(-(-B // 2), 128))
    padded_B = _round_up(B, TB)
    num_blocks = padded_B // TB
    pad = padded_B - B

    # ---- pad d on the (tiny) table so the (d, TB) tile matches the dtype
    # sublane tiling (16 for bf16, 8 for f32). Zero-padded d slots contribute 0.
    d_mult = 16 if is_bf16 else 8
    dp = _round_up(d, d_mult)
    Vt = V_table
    if dp != d:
        Vt = jnp.pad(Vt, ((0, 0), (0, 0), (0, dp - d)))
    Vt = Vt.astype(compute_dtype)
    Mc = M.astype(compute_dtype)

    # ---- pad batch in index space (row index 0 repeated; dropped at the end).
    x_p = jnp.pad(x, ((0, pad), (0, 0))) if pad else x

    # linear weights, batch-minor, blocked: [nb, F, TB]
    w_gp = jnp.take(w_table, x_p, axis=0).astype(jnp.float32)        # [padded_B, F]
    w_g = w_gp[:B]                                                    # for regularization
    w_blk = w_gp.reshape(num_blocks, TB, F).transpose(0, 2, 1)        # [nb, F, TB]

    # ---- field aggregation V0 = M @ V as one narrow-dtype MXU einsum that
    # writes directly into the blocked, batch-minor layout the kernel reads:
    # [nb, O-1, m, dp, TB] -> every grid step's tile is contiguous in HBM.
    V_g = jnp.take(Vt, x_p, axis=1)                                   # [O-1, padded_B, F, dp]
    V_g = V_g.reshape(order_minus_1, num_blocks, TB, F, dp)
    V0 = jnp.einsum('mf,onbfd->nomdb', Mc, V_g,
                    preferred_element_type=jnp.float32).astype(v0_dtype)

    w0_arr = jnp.reshape(w0, (1,)).astype(jnp.float32)

    # advisory cost estimate for XLA's scheduler around the custom call
    v0_bytes = num_blocks * order_minus_1 * num_field * dp * TB * jnp.dtype(v0_dtype).itemsize
    flops = padded_B * (F + sum(2 * t * num_field * dp for t in range(2, order + 1)))
    cost = pl.CostEstimate(flops=int(flops), transcendentals=0,
                           bytes_accessed=int(v0_bytes + padded_B * F * 4 + padded_B * 4))

    kernel = functools.partial(hfm_kernel, lane_strip=lane_strip)
    y = pl.pallas_call(
        kernel,
        out_shape=jax.ShapeDtypeStruct((num_blocks, TB), jnp.float32),
        grid_spec=pltpu.PrefetchScalarGridSpec(
            num_scalar_prefetch=0,
            grid=(num_blocks,),
            in_specs=[
                pl.BlockSpec(memory_space=pltpu.MemorySpace.SMEM),               # w0
                pl.BlockSpec((None, F, TB), lambda b: (b, 0, 0)),                # w  [nb,F,TB]
                pl.BlockSpec((None, order_minus_1, num_field, dp, TB),           # V0 [nb,O-1,m,dp,TB]
                             lambda b: (b, 0, 0, 0, 0)),
            ],
            out_specs=pl.BlockSpec((1, TB), lambda b: (b, 0)),
        ),
        compiler_params=pltpu.CompilerParams(
            dimension_semantics=("parallel",),
            vmem_limit_bytes=32 * 1024 * 1024,
        ),
        cost_estimate=cost,
    )(w0_arr, w_blk, V0)
    y = y.reshape(padded_B)[:B]

    # TODO(synk): `trace` helper is not defined in the source snippet; assumed
    # sum-of-squares (L2) regularization; the leftover V tensor after the
    # reference loop is empty for this enumeration so its term contributes 0.
    reg = alpha * jnp.sum(w_g ** 2) + beta * 0.0
    return y, reg


def _aggregate_ref(x, V_table, M, v0_dtype):
    """Reference-path field aggregation with the same quantization as the kernel path."""
    is_bf16 = jnp.dtype(v0_dtype) == jnp.dtype(jnp.bfloat16)
    cdt = jnp.bfloat16 if is_bf16 else jnp.float32
    Vg = jnp.take(V_table.astype(cdt), x, axis=1)                     # [O-1, B, F, d]
    V0 = jnp.einsum('mf,obfd->omdb', M.astype(cdt), Vg,
                    preferred_element_type=jnp.float32).astype(v0_dtype)
    return V0.astype(jnp.float32)                                      # [O-1, m, d, B]


def hfm_reference(x, w_table, V_table, M, w0, alpha, beta, v0_dtype=jnp.float32):
    """Plain-JAX mirror of the PyTorch masked strictly-ordered enumeration."""
    order = V_table.shape[0] + 1
    num_field = M.shape[0]
    w = jnp.take(w_table, x, axis=0).astype(jnp.float32)               # [B, F]
    V0 = _aggregate_ref(x, V_table, M, v0_dtype)                       # [O-1, m, d, B]
    y = jnp.asarray(w0, jnp.float32) + jnp.sum(w, axis=1)              # [B]
    for t in range(2, order + 1):
        lvl = t - 2
        contrib = jnp.zeros_like(y)
        for combo in itertools.combinations(range(num_field), t):
            prod = jnp.ones_like(V0[lvl, 0])                           # (d, B)
            for f in combo:
                prod = prod * V0[lvl, f]
            contrib = contrib + jnp.sum(prod, axis=0)
        y = y + contrib
    reg = alpha * jnp.sum(w ** 2) + beta * 0.0
    return y, reg


if __name__ == "__main__":
    B, F, num_field, n, d, order = 2, 8, 8, 40, 32, 3
    alpha, beta = 1e-4, 1e-4

    key = jax.random.PRNGKey(0)
    k1, k2, k3, k4, k5 = jax.random.split(key, 5)
    x = jax.random.randint(k1, (B, F), 0, n, dtype=jnp.int32)
    # synthetic deterministic parameter init (matches shapes in __init__)
    w_table = 0.1 * jax.random.normal(k2, (n,), jnp.float32)               # Embedding([n])
    V_table = 0.1 * jax.random.normal(k3, (order - 1, n, d), jnp.float32)  # Embedding([order-1, n, d])
    M = jax.random.normal(k4, (num_field, F), jnp.float32)                 # field matrix
    w0 = 0.01 * jax.random.normal(k5, (), jnp.float32)                     # bias

    # 1) exact-semantics check: f32 storage end to end vs the PyTorch-mirror ref
    y32, reg32 = hfm_forward(x, w_table, V_table, M, w0, alpha, beta,
                             v0_dtype=jnp.float32)
    jax.block_until_ready((y32, reg32))
    y_ref, reg_ref = hfm_reference(x, w_table, V_table, M, w0, alpha, beta,
                                   v0_dtype=jnp.float32)
    assert jnp.allclose(y32, y_ref, rtol=1e-3, atol=1e-3), (y32, y_ref)
    assert jnp.allclose(reg32, reg_ref, rtol=1e-5, atol=1e-7), (reg32, reg_ref)

    # 2) production config (bf16 V0 in HBM) vs a reference fed the same bf16 V0
    ybf, regbf = hfm_forward(x, w_table, V_table, M, w0, alpha, beta,
                             v0_dtype=jnp.bfloat16)
    jax.block_until_ready((ybf, regbf))
    y_ref_bf, _ = hfm_reference(x, w_table, V_table, M, w0, alpha, beta,
                                v0_dtype=jnp.bfloat16)
    assert jnp.allclose(ybf, y_ref_bf, rtol=5e-3, atol=5e-3), (ybf, y_ref_bf)

    # 3) bf16 config against the f32 reference (quantization-error budget check)
    assert jnp.allclose(ybf, y_ref, rtol=8e-2, atol=8e-2), (ybf, y_ref)

    print("KERNEL_OK")
</pallas_src>

<mosaic_0001>
module attributes {stable_mosaic.version = 11 : i64} {
  func.func @hfm_kernel(%arg0: i32, %arg1: memref<1xf32, #tpu.memory_space<smem>>, %arg2: memref<1x8x128xf32, #tpu.memory_space<vmem>>, %arg3: memref<1x2x8x32x128xf32, #tpu.memory_space<vmem>>, %arg4: memref<1x128xf32, #tpu.memory_space<vmem>>) attributes {dimension_semantics = [#tpu.dimension_semantics<parallel>], iteration_bounds = array<i64: 1>, scalar_prefetch = 0 : i64, scratch_operands = 0 : i64, tpu.core_type = #tpu.core_type<tc>, window_params = [{transform_indices = @transform_0, window_bounds = array<i64: 1>}, {transform_indices = @transform_1, window_bounds = array<i64: 1, 8, 128>}, {transform_indices = @transform_2, window_bounds = array<i64: 1, 2, 8, 32, 128>}, {transform_indices = @transform_3, window_bounds = array<i64: 1, 128>}]} {
    %c0 = arith.constant 0 : index
    %0 = memref.load %arg1[%c0] : memref<1xf32, #tpu.memory_space<smem>>
    %c0_0 = arith.constant 0 : index
    %c0_1 = arith.constant 0 : index
    %c0_2 = arith.constant 0 : index
    %1 = vector.load %arg2[%c0_0, %c0_1, %c0_2] : memref<1x8x128xf32, #tpu.memory_space<vmem>>, vector<1x8x128xf32>
    %2 = vector.shape_cast %1 : vector<1x8x128xf32> to vector<8x128xf32>
    %cst = arith.constant dense<0.000000e+00> : vector<128xf32>
    %3 = vector.multi_reduction <add>, %2, %cst [0] : vector<8x128xf32> to vector<128xf32>
    %4 = vector.shape_cast %3 : vector<128xf32> to vector<1x128xf32>
    %5 = vector.broadcast %0 : f32 to vector<1x128xf32>
    %6 = arith.addf %5, %4 : vector<1x128xf32>
    %c0_3 = arith.constant 0 : index
    %c0_4 = arith.constant 0 : index
    %c0_5 = arith.constant 0 : index
    %c0_6 = arith.constant 0 : index
    %c0_7 = arith.constant 0 : index
    %7 = vector.load %arg3[%c0_3, %c0_4, %c0_5, %c0_6, %c0_7] : memref<1x2x8x32x128xf32, #tpu.memory_space<vmem>>, vector<1x1x1x32x128xf32>
    %8 = vector.shape_cast %7 : vector<1x1x1x32x128xf32> to vector<32x128xf32>
    %c0_8 = arith.constant 0 : index
    %c0_9 = arith.constant 0 : index
    %c1 = arith.constant 1 : index
    %c0_10 = arith.constant 0 : index
    %c0_11 = arith.constant 0 : index
    %9 = vector.load %arg3[%c0_8, %c0_9, %c1, %c0_10, %c0_11] : memref<1x2x8x32x128xf32, #tpu.memory_space<vmem>>, vector<1x1x1x32x128xf32>
    %10 = vector.shape_cast %9 : vector<1x1x1x32x128xf32> to vector<32x128xf32>
    %11 = arith.mulf %10, %8 : vector<32x128xf32>
    %12 = arith.addf %8, %10 : vector<32x128xf32>
    %c0_12 = arith.constant 0 : index
    %c0_13 = arith.constant 0 : index
    %c2 = arith.constant 2 : index
    %c0_14 = arith.constant 0 : index
    %c0_15 = arith.constant 0 : index
    %13 = vector.load %arg3[%c0_12, %c0_13, %c2, %c0_14, %c0_15] : memref<1x2x8x32x128xf32, #tpu.memory_space<vmem>>, vector<1x1x1x32x128xf32>
    %14 = vector.shape_cast %13 : vector<1x1x1x32x128xf32> to vector<32x128xf32>
    %15 = arith.mulf %14, %12 : vector<32x128xf32>
    %16 = arith.addf %11, %15 : vector<32x128xf32>
    %17 = arith.addf %12, %14 : vector<32x128xf32>
    %c0_16 = arith.constant 0 : index
    %c0_17 = arith.constant 0 : index
    %c3 = arith.constant 3 : index
    %c0_18 = arith.constant 0 : index
    %c0_19 = arith.constant 0 : index
    %18 = vector.load %arg3[%c0_16, %c0_17, %c3, %c0_18, %c0_19] : memref<1x2x8x32x128xf32, #tpu.memory_space<vmem>>, vector<1x1x1x32x128xf32>
    %19 = vector.shape_cast %18 : vector<1x1x1x32x128xf32> to vector<32x128xf32>
    %20 = arith.mulf %19, %17 : vector<32x128xf32>
    %21 = arith.addf %16, %20 : vector<32x128xf32>
    %22 = arith.addf %17, %19 : vector<32x128xf32>
    %c0_20 = arith.constant 0 : index
    %c0_21 = arith.constant 0 : index
    %c4 = arith.constant 4 : index
    %c0_22 = arith.constant 0 : index
    %c0_23 = arith.constant 0 : index
    %23 = vector.load %arg3[%c0_20, %c0_21, %c4, %c0_22, %c0_23] : memref<1x2x8x32x128xf32, #tpu.memory_space<vmem>>, vector<1x1x1x32x128xf32>
    %24 = vector.shape_cast %23 : vector<1x1x1x32x128xf32> to vector<32x128xf32>
    %25 = arith.mulf %24, %22 : vector<32x128xf32>
    %26 = arith.addf %21, %25 : vector<32x128xf32>
    %27 = arith.addf %22, %24 : vector<32x128xf32>
    %c0_24 = arith.constant 0 : index
    %c0_25 = arith.constant 0 : index
    %c5 = arith.constant 5 : index
    %c0_26 = arith.constant 0 : index
    %c0_27 = arith.constant 0 : index
    %28 = vector.load %arg3[%c0_24, %c0_25, %c5, %c0_26, %c0_27] : memref<1x2x8x32x128xf32, #tpu.memory_space<vmem>>, vector<1x1x1x32x128xf32>
    %29 = vector.shape_cast %28 : vector<1x1x1x32x128xf32> to vector<32x128xf32>
    %30 = arith.mulf %29, %27 : vector<32x128xf32>
    %31 = arith.addf %26, %30 : vector<32x128xf32>
    %32 = arith.addf %27, %29 : vector<32x128xf32>
    %c0_28 = arith.constant 0 : index
    %c0_29 = arith.constant 0 : index
    %c6 = arith.constant 6 : index
    %c0_30 = arith.constant 0 : index
    %c0_31 = arith.constant 0 : index
    %33 = vector.load %arg3[%c0_28, %c0_29, %c6, %c0_30, %c0_31] : memref<1x2x8x32x128xf32, #tpu.memory_space<vmem>>, vector<1x1x1x32x128xf32>
    %34 = vector.shape_cast %33 : vector<1x1x1x32x128xf32> to vector<32x128xf32>
    %35 = arith.mulf %34, %32 : vector<32x128xf32>
    %36 = arith.addf %31, %35 : vector<32x128xf32>
    %37 = arith.addf %32, %34 : vector<32x128xf32>
    %c0_32 = arith.constant 0 : index
    %c0_33 = arith.constant 0 : index
    %c7 = arith.constant 7 : index
    %c0_34 = arith.constant 0 : index
    %c0_35 = arith.constant 0 : index
    %38 = vector.load %arg3[%c0_32, %c0_33, %c7, %c0_34, %c0_35] : memref<1x2x8x32x128xf32, #tpu.memory_space<vmem>>, vector<1x1x1x32x128xf32>
    %39 = vector.shape_cast %38 : vector<1x1x1x32x128xf32> to vector<32x128xf32>
    %40 = arith.mulf %39, %37 : vector<32x128xf32>
    %41 = arith.addf %36, %40 : vector<32x128xf32>
    %cst_36 = arith.constant dense<0.000000e+00> : vector<128xf32>
    %42 = vector.multi_reduction <add>, %41, %cst_36 [0] : vector<32x128xf32> to vector<128xf32>
    %43 = vector.shape_cast %42 : vector<128xf32> to vector<1x128xf32>
    %44 = arith.addf %6, %43 : vector<1x128xf32>
    %c0_37 = arith.constant 0 : index
    %c1_38 = arith.constant 1 : index
    %c0_39 = arith.constant 0 : index
    %c0_40 = arith.constant 0 : index
    %c0_41 = arith.constant 0 : index
    %45 = vector.load %arg3[%c0_37, %c1_38, %c0_39, %c0_40, %c0_41] : memref<1x2x8x32x128xf32, #tpu.memory_space<vmem>>, vector<1x1x1x32x128xf32>
    %46 = vector.shape_cast %45 : vector<1x1x1x32x128xf32> to vector<32x128xf32>
    %c0_42 = arith.constant 0 : index
    %c1_43 = arith.constant 1 : index
    %c1_44 = arith.constant 1 : index
    %c0_45 = arith.constant 0 : index
    %c0_46 = arith.constant 0 : index
    %47 = vector.load %arg3[%c0_42, %c1_43, %c1_44, %c0_45, %c0_46] : memref<1x2x8x32x128xf32, #tpu.memory_space<vmem>>, vector<1x1x1x32x128xf32>
    %48 = vector.shape_cast %47 : vector<1x1x1x32x128xf32> to vector<32x128xf32>
    %49 = arith.mulf %48, %46 : vector<32x128xf32>
    %50 = arith.addf %46, %48 : vector<32x128xf32>
    %c0_47 = arith.constant 0 : index
    %c1_48 = arith.constant 1 : index
    %c2_49 = arith.constant 2 : index
    %c0_50 = arith.constant 0 : index
    %c0_51 = arith.constant 0 : index
    %51 = vector.load %arg3[%c0_47, %c1_48, %c2_49, %c0_50, %c0_51] : memref<1x2x8x32x128xf32, #tpu.memory_space<vmem>>, vector<1x1x1x32x128xf32>
    %52 = vector.shape_cast %51 : vector<1x1x1x32x128xf32> to vector<32x128xf32>
    %53 = arith.mulf %52, %49 : vector<32x128xf32>
    %54 = arith.mulf %52, %50 : vector<32x128xf32>
    %55 = arith.addf %49, %54 : vector<32x128xf32>
    %56 = arith.addf %50, %52 : vector<32x128xf32>
    %c0_52 = arith.constant 0 : index
    %c1_53 = arith.constant 1 : index
    %c3_54 = arith.constant 3 : index
    %c0_55 = arith.constant 0 : index
    %c0_56 = arith.constant 0 : index
    %57 = vector.load %arg3[%c0_52, %c1_53, %c3_54, %c0_55, %c0_56] : memref<1x2x8x32x128xf32, #tpu.memory_space<vmem>>, vector<1x1x1x32x128xf32>
    %58 = vector.shape_cast %57 : vector<1x1x1x32x128xf32> to vector<32x128xf32>
    %59 = arith.mulf %58, %55 : vector<32x128xf32>
    %60 = arith.addf %53, %59 : vector<32x128xf32>
    %61 = arith.mulf %58, %56 : vector<32x128xf32>
    %62 = arith.addf %55, %61 : vector<32x128xf32>
    %63 = arith.addf %56, %58 : vector<32x128xf32>
    %c0_57 = arith.constant 0 : index
    %c1_58 = arith.constant 1 : index
    %c4_59 = arith.constant 4 : index
    %c0_60 = arith.constant 0 : index
    %c0_61 = arith.constant 0 : index
    %64 = vector.load %arg3[%c0_57, %c1_58, %c4_59, %c0_60, %c0_61] : memref<1x2x8x32x128xf32, #tpu.memory_space<vmem>>, vector<1x1x1x32x128xf32>
    %65 = vector.shape_cast %64 : vector<1x1x1x32x128xf32> to vector<32x128xf32>
    %66 = arith.mulf %65, %62 : vector<32x128xf32>
    %67 = arith.addf %60, %66 : vector<32x128xf32>
    %68 = arith.mulf %65, %63 : vector<32x128xf32>
    %69 = arith.addf %62, %68 : vector<32x128xf32>
    %70 = arith.addf %63, %65 : vector<32x128xf32>
    %c0_62 = arith.constant 0 : index
    %c1_63 = arith.constant 1 : index
    %c5_64 = arith.constant 5 : index
    %c0_65 = arith.constant 0 : index
    %c0_66 = arith.constant 0 : index
    %71 = vector.load %arg3[%c0_62, %c1_63, %c5_64, %c0_65, %c0_66] : memref<1x2x8x32x128xf32, #tpu.memory_space<vmem>>, vector<1x1x1x32x128xf32>
    %72 = vector.shape_cast %71 : vector<1x1x1x32x128xf32> to vector<32x128xf32>
    %73 = arith.mulf %72, %69 : vector<32x128xf32>
    %74 = arith.addf %67, %73 : vector<32x128xf32>
    %75 = arith.mulf %72, %70 : vector<32x128xf32>
    %76 = arith.addf %69, %75 : vector<32x128xf32>
    %77 = arith.addf %70, %72 : vector<32x128xf32>
    %c0_67 = arith.constant 0 : index
    %c1_68 = arith.constant 1 : index
    %c6_69 = arith.constant 6 : index
    %c0_70 = arith.constant 0 : index
    %c0_71 = arith.constant 0 : index
    %78 = vector.load %arg3[%c0_67, %c1_68, %c6_69, %c0_70, %c0_71] : memref<1x2x8x32x128xf32, #tpu.memory_space<vmem>>, vector<1x1x1x32x128xf32>
    %79 = vector.shape_cast %78 : vector<1x1x1x32x128xf32> to vector<32x128xf32>
    %80 = arith.mulf %79, %76 : vector<32x128xf32>
    %81 = arith.addf %74, %80 : vector<32x128xf32>
    %82 = arith.mulf %79, %77 : vector<32x128xf32>
    %83 = arith.addf %76, %82 : vector<32x128xf32>
    %c0_72 = arith.constant 0 : index
    %c1_73 = arith.constant 1 : index
    %c7_74 = arith.constant 7 : index
    %c0_75 = arith.constant 0 : index
    %c0_76 = arith.constant 0 : index
    %84 = vector.load %arg3[%c0_72, %c1_73, %c7_74, %c0_75, %c0_76] : memref<1x2x8x32x128xf32, #tpu.memory_space<vmem>>, vector<1x1x1x32x128xf32>
    %85 = vector.shape_cast %84 : vector<1x1x1x32x128xf32> to vector<32x128xf32>
    %86 = arith.mulf %85, %83 : vector<32x128xf32>
    %87 = arith.addf %81, %86 : vector<32x128xf32>
    %cst_77 = arith.constant dense<0.000000e+00> : vector<128xf32>
    %88 = vector.multi_reduction <add>, %87, %cst_77 [0] : vector<32x128xf32> to vector<128xf32>
    %89 = vector.shape_cast %88 : vector<128xf32> to vector<1x128xf32>
    %90 = arith.addf %44, %89 : vector<1x128xf32>
    %c0_78 = arith.constant 0 : index
    %c0_79 = arith.constant 0 : index
    %91 = vector.load %arg4[%c0_78, %c0_79] : memref<1x128xf32, #tpu.memory_space<vmem>>, vector<1x128xf32>
    tpu.vector_store %arg4[%c0_78, %c0_79], %90 {strides = array<i32>} : memref<1x128xf32, #tpu.memory_space<vmem>>, vector<1x128xf32>,
    return
  }
  func.func @transform_0(%arg0: i32) -> i32 {
    %c0_i32 = arith.constant 0 : i32
    %c0_i32_0 = arith.constant 0 : i32
    return %c0_i32 : i32
  }
  func.func @transform_1(%arg0: i32) -> (i32, i32, i32) {
    %c0_i32 = arith.constant 0 : i32
    %c0_i32_0 = arith.constant 0 : i32
    %c0_i32_1 = arith.constant 0 : i32
    return %arg0, %c0_i32, %c0_i32_0 : i32, i32, i32
  }
  func.func @transform_2(%arg0: i32) -> (i32, i32, i32, i32, i32) {
    %c0_i32 = arith.constant 0 : i32
    %c0_i32_0 = arith.constant 0 : i32
    %c0_i32_1 = arith.constant 0 : i32
    %c0_i32_2 = arith.constant 0 : i32
    %c0_i32_3 = arith.constant 0 : i32
    return %arg0, %c0_i32, %c0_i32_0, %c0_i32_1, %c0_i32_2 : i32, i32, i32, i32, i32
  }
  func.func @transform_3(%arg0: i32) -> (i32, i32) {
    %c0_i32 = arith.constant 0 : i32
    %c0_i32_0 = arith.constant 0 : i32
    return %arg0, %c0_i32 : i32, i32
  }
}

</mosaic_0001>

<llo_original>
// kernel: tpu_custom_call.1
$region0: #{tpu_custom_call.1}
  #allocation0 [shape = 'u32[]', space=smem, size = 0x4, offset = 0x4, fixed_abs, tag = 'smem constant byte address 0x4 - core index']
  #allocation1 [shape = 'u32[144,128]{1,0:T(1,128)}', space=vmem, size = 0x12000, scoped, tag = 'internal scratch']
  #allocation2 [shape = 'f32[1]{0:T(128)S(6)}', space=smem, size = 0x200, scoped, tag = 'scoped memory for tpu_custom_call.1']
  %s0 = inlined_call_operand.<no memory space> [shape: f32[1], index: 0, kind: input, shape index: {}]
  %s1 = inlined_call_operand.hbm [shape: f32[1,8,128], index: 1, kind: input, shape index: {}]
  %s2 = inlined_call_operand.hbm [shape: f32[1,2,8,32,128], index: 2, kind: input, shape index: {}]
  %s3 = inlined_call_operand.hbm [shape: f32[1,128], index: 3, kind: output, shape index: {}]
  %s4 = sld [smem:[#allocation0]]
  $region30: #{tpu_custom_call.1} parent=0
    _
  %s6 = ssub.s32 1, %s4
  %s7 = scalar_select 0, %s6, %s4
  %8 = sst [smem:[#allocation2]] %s0
  $region1: #{tpu_custom_call.1} parent=0
    #allocation3 [shape = 'u8[4096]{0}', space=vmem, size = 0x1000, scoped, tag = 'input window, operand 1, single buffered']
    #allocation4 [shape = 's32[1]{0}', space=sflag, size = 0x4, scoped, tag = 'scoped memory for tpu_custom_call.1']
    #allocation5 [shape = 's32[1]{0}', space=sflag, size = 0x4, scoped, tag = 'scoped memory for tpu_custom_call.1']
    #allocation6 [shape = 'u8[262144]{0}', space=vmem, size = 0x40000, scoped, tag = 'input window, operand 2, single buffered']
    #allocation7 [shape = 's32[1]{0}', space=sflag, size = 0x4, scoped, tag = 'scoped memory for tpu_custom_call.1']
    #allocation8 [shape = 'u8[512]{0}', space=vmem, size = 0x400, scoped, tag = 'output window, operand 0, single buffered']
    %9 = vsyncpa [#allocation4], 0
    %10 = vsyncpa [#allocation7], 0
    %11 = vsyncpa [#allocation5], 0
    // Predicated region
    $region2: #{tpu_custom_call.1} parent=1 // pred_check
      _
    $region3: #{tpu_custom_call.1} parent=1 // pred_check_branch
      %13 = sbr.rel (0) target = $region5
    $region4: #{tpu_custom_call.1} parent=1 // pred_region
      _
    $region5: #{tpu_custom_call.1} parent=1 // pred_fallthru
      _
    // Predicated region
    $region6: #{tpu_custom_call.1} parent=1 // pred_check
      _
    $region7: #{tpu_custom_call.1} parent=1 // pred_check_branch
      %15 = sbr.rel (0) target = $region9
    $region8: #{tpu_custom_call.1} parent=1 // pred_region
      %s17 = ssub.s32 128, 128
      %18 = vsyncadd [#allocation4], %s17
      %s20 = sshll.u32 [#allocation3], 4
      %s21 = int_to_ptr.vmem [resolvable:$true] %s20
      %23 = dma.hbm_to_vmem [thread:$0]  %s1, 128, %s21, [#allocation4]
    $region9: #{tpu_custom_call.1} parent=1 // pred_fallthru
      _
    // Predicated region
    $region10: #{tpu_custom_call.1} parent=1 // pred_check
      _
    $region11: #{tpu_custom_call.1} parent=1 // pred_check_branch
      %25 = sbr.rel (0) target = $region13
    $region12: #{tpu_custom_call.1} parent=1 // pred_region
      %s27 = ssub.s32 8192, 8192
      %28 = vsyncadd [#allocation7], %s27
      %s29 = sshll.u32 [#allocation6], 4
      %s30 = int_to_ptr.vmem [resolvable:$true] %s29
      %35 = dma.hbm_to_vmem [thread:$0]  %s2, 8192, %s30, [#allocation7], 128, 128, 8
    $region13: #{tpu_custom_call.1} parent=1 // pred_fallthru
      _
    // Predicated region
    $region14: #{tpu_custom_call.1} parent=1 // pred_check
      _
    $region15: #{tpu_custom_call.1} parent=1 // pred_check_branch
      %37 = sbr.rel (0) target = $region17
    $region16: #{tpu_custom_call.1} parent=1 // pred_region
      %38 = dma.done [#allocation4], 128
    $region17: #{tpu_custom_call.1} parent=1 // pred_fallthru
      _
    // Predicated region
    $region18: #{tpu_custom_call.1} parent=1 // pred_check
      _
    $region19: #{tpu_custom_call.1} parent=1 // pred_check_branch
      %40 = sbr.rel (0) target = $region21
    $region20: #{tpu_custom_call.1} parent=1 // pred_region
      %41 = dma.done [#allocation7], 8192
    $region21: #{tpu_custom_call.1} parent=1 // pred_fallthru
      _
    %s42 = sld [smem:[#allocation2]]
    %v43 = vld [vmem:[#allocation3] sm:$0xff]
    %v44 = vrot.slane %v43, 4
    %v45 = vadd.f32 %v43, %v44
    %v46 = vrot.slane %v45, 2
    %v47 = vadd.f32 %v45, %v46
    %v48 = vrot.slane %v47, 1
    %v49 = vadd.f32 %v47, %v48
    %v50 = vstv %s42
    %v51 = vadd.f32 %v50, %v49
    %v52 = vld [vmem:[#allocation6] sm:$0xff]
    %v53 = vld [vmem:[#allocation6 + $0x8] sm:$0xff]
    %v54 = vld [vmem:[#allocation6 + $0x10] sm:$0xff]
    %v55 = vld [vmem:[#allocation6 + $0x18] sm:$0xff]
    %s56 = scalar_lea.vmem [#allocation6], 32
    %v57 = vld [vmem:[%s56] sm:$0xff]
    %v58 = vld [vmem:[%s56 + $0x8] sm:$0xff]
    %v59 = vld [vmem:[%s56 + $0x10] sm:$0xff]
    %v60 = vld [vmem:[%s56 + $0x18] sm:$0xff]
    %v61 = vmul.f32 %v57, %v52
    %v62 = vmul.f32 %v58, %v53
    %v63 = vmul.f32 %v59, %v54
    %v64 = vmul.f32 %v60, %v55
    %v65 = vadd.f32 %v52, %v57
    %v66 = vadd.f32 %v53, %v58
    %v67 = vadd.f32 %v54, %v59
    %v68 = vadd.f32 %v55, %v60
    %s69 = scalar_lea.vmem [#allocation6], 64
    %v70 = vld [vmem:[%s69] sm:$0xff]
    %v71 = vld [vmem:[%s69 + $0x8] sm:$0xff]
    %v72 = vld [vmem:[%s69 + $0x10] sm:$0xff]
    %v73 = vld [vmem:[%s69 + $0x18] sm:$0xff]
    %v74 = vmul.f32 %v70, %v65
    %v75 = vmul.f32 %v71, %v66
    %v76 = vmul.f32 %v72, %v67
    %v77 = vmul.f32 %v73, %v68
    %v78 = vadd.f32 %v61, %v74
    %v79 = vadd.f32 %v62, %v75
    %v80 = vadd.f32 %v63, %v76
    %v81 = vadd.f32 %v64, %v77
    %v82 = vadd.f32 %v65, %v70
    %v83 = vadd.f32 %v66, %v71
    %v84 = vadd.f32 %v67, %v72
    %v85 = vadd.f32 %v68, %v73
    %s86 = scalar_lea.vmem [#allocation6], 96
    %v87 = vld [vmem:[%s86] sm:$0xff]
    %v88 = vld [vmem:[%s86 + $0x8] sm:$0xff]
    %v89 = vld [vmem:[%s86 + $0x10] sm:$0xff]
    %v90 = vld [vmem:[%s86 + $0x18] sm:$0xff]
    %v91 = vmul.f32 %v87, %v82
    %v92 = vmul.f32 %v88, %v83
    %v93 = vmul.f32 %v89, %v84
    %v94 = vmul.f32 %v90, %v85
    %v95 = vadd.f32 %v78, %v91
    %v96 = vadd.f32 %v79, %v92
    %v97 = vadd.f32 %v80, %v93
    %v98 = vadd.f32 %v81, %v94
    %v99 = vadd.f32 %v82, %v87
    %v100 = vadd.f32 %v83, %v88
    %v101 = vadd.f32 %v84, %v89
    %v102 = vadd.f32 %v85, %v90
    %s103 = scalar_lea.vmem [#allocation6], 128
    %v104 = vld [vmem:[%s103] sm:$0xff]
    %v105 = vld [vmem:[%s103 + $0x8] sm:$0xff]
    %v106 = vld [vmem:[%s103 + $0x10] sm:$0xff]
    %v107 = vld [vmem:[%s103 + $0x18] sm:$0xff]
    %v108 = vmul.f32 %v104, %v99
    %v109 = vmul.f32 %v105, %v100
    %v110 = vmul.f32 %v106, %v101
    %v111 = vmul.f32 %v107, %v102
    %v112 = vadd.f32 %v95, %v108
    %v113 = vadd.f32 %v96, %v109
    %v114 = vadd.f32 %v97, %v110
    %v115 = vadd.f32 %v98, %v111
    %v116 = vadd.f32 %v99, %v104
    %v117 = vadd.f32 %v100, %v105
    %v118 = vadd.f32 %v101, %v106
    %v119 = vadd.f32 %v102, %v107
    %s120 = scalar_lea.vmem [#allocation6], 160
    %v121 = vld [vmem:[%s120] sm:$0xff]
    %v122 = vld [vmem:[%s120 + $0x8] sm:$0xff]
    %v123 = vld [vmem:[%s120 + $0x10] sm:$0xff]
    %v124 = vld [vmem:[%s120 + $0x18] sm:$0xff]
    %v125 = vmul.f32 %v121, %v116
    %v126 = vmul.f32 %v122, %v117
    %v127 = vmul.f32 %v123, %v118
    %v128 = vmul.f32 %v124, %v119
    %v129 = vadd.f32 %v112, %v125
    %v130 = vadd.f32 %v113, %v126
    %v131 = vadd.f32 %v114, %v127
    %v132 = vadd.f32 %v115, %v128
    %v133 = vadd.f32 %v116, %v121
    %v134 = vadd.f32 %v117, %v122
    %v135 = vadd.f32 %v118, %v123
    %v136 = vadd.f32 %v119, %v124
    %s137 = scalar_lea.vmem [#allocation6], 192
    %v138 = vld [vmem:[%s137] sm:$0xff]
    %v139 = vld [vmem:[%s137 + $0x8] sm:$0xff]
    %v140 = vld [vmem:[%s137 + $0x10] sm:$0xff]
    %v141 = vld [vmem:[%s137 + $0x18] sm:$0xff]
    %v142 = vmul.f32 %v138, %v133
    %v143 = vmul.f32 %v139, %v134
    %v144 = vmul.f32 %v140, %v135
    %v145 = vmul.f32 %v141, %v136
    %v146 = vadd.f32 %v129, %v142
    %v147 = vadd.f32 %v130, %v143
    %v148 = vadd.f32 %v131, %v144
    %v149 = vadd.f32 %v132, %v145
    %v150 = vadd.f32 %v133, %v138
    %v151 = vadd.f32 %v134, %v139
    %v152 = vadd.f32 %v135, %v140
    %v153 = vadd.f32 %v136, %v141
    %s154 = scalar_lea.vmem [#allocation6], 224
    %v155 = vld [vmem:[%s154] sm:$0xff]
    %v156 = vld [vmem:[%s154 + $0x8] sm:$0xff]
    %v157 = vld [vmem:[%s154 + $0x10] sm:$0xff]
    %v158 = vld [vmem:[%s154 + $0x18] sm:$0xff]
    %v159 = vmul.f32 %v155, %v150
    %v160 = vmul.f32 %v156, %v151
    %v161 = vmul.f32 %v157, %v152
    %v162 = vmul.f32 %v158, %v153
    %v163 = vadd.f32 %v146, %v159
    %v164 = vadd.f32 %v147, %v160
    %v165 = vadd.f32 %v148, %v161
    %v166 = vadd.f32 %v149, %v162
    %v167 = vadd.f32 %v163, %v164
    %v168 = vadd.f32 %v167, %v165
    %v169 = vadd.f32 %v168, %v166
    %v170 = vrot.slane %v169, 4
    %v171 = vadd.f32 %v169, %v170
    %v172 = vrot.slane %v171, 2
    %v173 = vadd.f32 %v171, %v172
    %v174 = vrot.slane %v173, 1
    %v175 = vadd.f32 %v173, %v174
    %v176 = vadd.f32 %v51, %v175
    %s177 = scalar_lea.vmem [#allocation6], 256
    %v178 = vld [vmem:[%s177] sm:$0xff]
    %v179 = vld [vmem:[%s177 + $0x8] sm:$0xff]
    %v180 = vld [vmem:[%s177 + $0x10] sm:$0xff]
    %v181 = vld [vmem:[%s177 + $0x18] sm:$0xff]
    %s182 = scalar_lea.vmem [#allocation6], 288
    %v183 = vld [vmem:[%s182] sm:$0xff]
    %v184 = vld [vmem:[%s182 + $0x8] sm:$0xff]
    %v185 = vld [vmem:[%s182 + $0x10] sm:$0xff]
    %v186 = vld [vmem:[%s182 + $0x18] sm:$0xff]
    %v187 = vmul.f32 %v183, %v178
    %v188 = vmul.f32 %v184, %v179
    %v189 = vmul.f32 %v185, %v180
    %v190 = vmul.f32 %v186, %v181
    %v191 = vadd.f32 %v178, %v183
    %v192 = vadd.f32 %v179, %v184
    %v193 = vadd.f32 %v180, %v185
    %v194 = vadd.f32 %v181, %v186
    %s195 = scalar_lea.vmem [#allocation6], 320
    %v196 = vld [vmem:[%s195] sm:$0xff]
    %v197 = vld [vmem:[%s195 + $0x8] sm:$0xff]
    %v198 = vld [vmem:[%s195 + $0x10] sm:$0xff]
    %v199 = vld [vmem:[%s195 + $0x18] sm:$0xff]
    %v200 = vmul.f32 %v196, %v187
    %v201 = vmul.f32 %v197, %v188
    %v202 = vmul.f32 %v198, %v189
    %v203 = vmul.f32 %v199, %v190
    %v204 = vmul.f32 %v196, %v191
    %v205 = vmul.f32 %v197, %v192
    %v206 = vmul.f32 %v198, %v193
    %v207 = vmul.f32 %v199, %v194
    %v208 = vadd.f32 %v187, %v204
    %v209 = vadd.f32 %v188, %v205
    %v210 = vadd.f32 %v189, %v206
    %v211 = vadd.f32 %v190, %v207
    %v212 = vadd.f32 %v191, %v196
    %v213 = vadd.f32 %v192, %v197
    %v214 = vadd.f32 %v193, %v198
    %v215 = vadd.f32 %v194, %v199
    %s216 = scalar_lea.vmem [#allocation6], 352
    %v217 = vld [vmem:[%s216] sm:$0xff]
    %v218 = vld [vmem:[%s216 + $0x8] sm:$0xff]
    %v219 = vld [vmem:[%s216 + $0x10] sm:$0xff]
    %v220 = vld [vmem:[%s216 + $0x18] sm:$0xff]
    %v221 = vmul.f32 %v217, %v208
    %v222 = vmul.f32 %v218, %v209
    %v223 = vmul.f32 %v219, %v210
    %v224 = vmul.f32 %v220, %v211
    %v225 = vadd.f32 %v200, %v221
    %v226 = vadd.f32 %v201, %v222
    %v227 = vadd.f32 %v202, %v223
    %v228 = vadd.f32 %v203, %v224
    %v229 = vmul.f32 %v217, %v212
    %v230 = vmul.f32 %v218, %v213
    %v231 = vmul.f32 %v219, %v214
    %v232 = vmul.f32 %v220, %v215
    %v233 = vadd.f32 %v208, %v229
    %v234 = vadd.f32 %v209, %v230
    %v235 = vadd.f32 %v210, %v231
    %v236 = vadd.f32 %v211, %v232
    %v237 = vadd.f32 %v212, %v217
    %v238 = vadd.f32 %v213, %v218
    %v239 = vadd.f32 %v214, %v219
    %v240 = vadd.f32 %v215, %v220
    %s241 = scalar_lea.vmem [#allocation6], 384
    %v242 = vld [vmem:[%s241] sm:$0xff]
    %v243 = vld [vmem:[%s241 + $0x8] sm:$0xff]
    %v244 = vld [vmem:[%s241 + $0x10] sm:$0xff]
    %v245 = vld [vmem:[%s241 + $0x18] sm:$0xff]
    %v246 = vmul.f32 %v242, %v233
    %v247 = vmul.f32 %v243, %v234
    %v248 = vmul.f32 %v244, %v235
    %v249 = vmul.f32 %v245, %v236
    %v250 = vadd.f32 %v225, %v246
    %v251 = vadd.f32 %v226, %v247
    %v252 = vadd.f32 %v227, %v248
    %v253 = vadd.f32 %v228, %v249
    %v254 = vmul.f32 %v242, %v237
    %v255 = vmul.f32 %v243, %v238
    %v256 = vmul.f32 %v244, %v239
    %v257 = vmul.f32 %v245, %v240
    %v258 = vadd.f32 %v233, %v254
    %v259 = vadd.f32 %v234, %v255
    %v260 = vadd.f32 %v235, %v256
    %v261 = vadd.f32 %v236, %v257
    %v262 = vadd.f32 %v237, %v242
    %v263 = vadd.f32 %v238, %v243
    %v264 = vadd.f32 %v239, %v244
    %v265 = vadd.f32 %v240, %v245
    %s266 = scalar_lea.vmem [#allocation6], 416
    %v267 = vld [vmem:[%s266] sm:$0xff]
    %v268 = vld [vmem:[%s266 + $0x8] sm:$0xff]
    %v269 = vld [vmem:[%s266 + $0x10] sm:$0xff]
    %v270 = vld [vmem:[%s266 + $0x18] sm:$0xff]
    %v271 = vmul.f32 %v267, %v258
    %v272 = vmul.f32 %v268, %v259
    %v273 = vmul.f32 %v269, %v260
    %v274 = vmul.f32 %v270, %v261
    %v275 = vadd.f32 %v250, %v271
    %v276 = vadd.f32 %v251, %v272
    %v277 = vadd.f32 %v252, %v273
    %v278 = vadd.f32 %v253, %v274
    %v279 = vmul.f32 %v267, %v262
    %v280 = vmul.f32 %v268, %v263
    %v281 = vmul.f32 %v269, %v264
    %v282 = vmul.f32 %v270, %v265
    %v283 = vadd.f32 %v258, %v279
    %v284 = vadd.f32 %v259, %v280
    %v285 = vadd.f32 %v260, %v281
    %v286 = vadd.f32 %v261, %v282
    %v287 = vadd.f32 %v262, %v267
    %v288 = vadd.f32 %v263, %v268
    %v289 = vadd.f32 %v264, %v269
    %v290 = vadd.f32 %v265, %v270
    %s291 = scalar_lea.vmem [#allocation6], 448
    %v292 = vld [vmem:[%s291] sm:$0xff]
    %v293 = vld [vmem:[%s291 + $0x8] sm:$0xff]
    %v294 = vld [vmem:[%s291 + $0x10] sm:$0xff]
    %v295 = vld [vmem:[%s291 + $0x18] sm:$0xff]
    %v296 = vmul.f32 %v292, %v283
    %v297 = vmul.f32 %v293, %v284
    %v298 = vmul.f32 %v294, %v285
    %v299 = vmul.f32 %v295, %v286
    %v300 = vadd.f32 %v275, %v296
    %v301 = vadd.f32 %v276, %v297
    %v302 = vadd.f32 %v277, %v298
    %v303 = vadd.f32 %v278, %v299
    %v304 = vmul.f32 %v292, %v287
    %v305 = vmul.f32 %v293, %v288
    %v306 = vmul.f32 %v294, %v289
    %v307 = vmul.f32 %v295, %v290
    %v308 = vadd.f32 %v283, %v304
    %v309 = vadd.f32 %v284, %v305
    %v310 = vadd.f32 %v285, %v306
    %v311 = vadd.f32 %v286, %v307
    %s312 = scalar_lea.vmem [#allocation6], 480
    %v313 = vld [vmem:[%s312] sm:$0xff]
    %v314 = vld [vmem:[%s312 + $0x8] sm:$0xff]
    %v315 = vld [vmem:[%s312 + $0x10] sm:$0xff]
    %v316 = vld [vmem:[%s312 + $0x18] sm:$0xff]
    %v317 = vmul.f32 %v313, %v308
    %v318 = vmul.f32 %v314, %v309
    %v319 = vmul.f32 %v315, %v310
    %v320 = vmul.f32 %v316, %v311
    %v321 = vadd.f32 %v300, %v317
    %v322 = vadd.f32 %v301, %v318
    %v323 = vadd.f32 %v302, %v319
    %v324 = vadd.f32 %v303, %v320
    %v325 = vadd.f32 %v321, %v322
    %v326 = vadd.f32 %v325, %v323
    %v327 = vadd.f32 %v326, %v324
    %v328 = vrot.slane %v327, 4
    %v329 = vadd.f32 %v327, %v328
    %v330 = vrot.slane %v329, 2
    %v331 = vadd.f32 %v329, %v330
    %v332 = vrot.slane %v331, 1
    %v333 = vadd.f32 %v331, %v332
    %v334 = vadd.f32 %v176, %v333
    %335 = vst [vmem:[#allocation8] sm:$0x1] %v334
    // Predicated region
    $region22: #{tpu_custom_call.1} parent=1 // pred_check
      _
    $region23: #{tpu_custom_call.1} parent=1 // pred_check_branch
      %337 = sbr.rel (0) target = $region25
    $region24: #{tpu_custom_call.1} parent=1 // pred_region
      %s339 = ssub.s32 16, 16
      %340 = vsyncadd [#allocation5], %s339
      %s342 = sshll.u32 [#allocation8], 4
      %s343 = int_to_ptr.vmem [resolvable:$true] %s342
      %345 = dma.vmem_to_hbm [thread:$0]  %s343, 16, %s3, [#allocation5]
    $region25: #{tpu_custom_call.1} parent=1 // pred_fallthru
      _
    // Predicated region
    $region26: #{tpu_custom_call.1} parent=1 // pred_check
      _
    $region27: #{tpu_custom_call.1} parent=1 // pred_check_branch
      %347 = sbr.rel (0) target = $region29
    $region28: #{tpu_custom_call.1} parent=1 // pred_region
      %348 = dma.done [#allocation5], 16
    $region29: #{tpu_custom_call.1} parent=1 // pred_fallthru
      _
    %349 = vsyncpa [#allocation4], 1
    %350 = vsyncpa [#allocation7], 1
    %351 = vsyncpa [#allocation5], 1

</llo_original>
